<compile_context>
chip_gen: v6e
topology: v6e:2x2x1
jax: 0.10.0
libtpu: 0.0.40
codegen_flags: <defaults>
</compile_context>

<pallas_src>
import functools

import jax
import jax.numpy as jnp
from jax.experimental import pallas as pl
from jax.experimental.pallas import tpu as pltpu

HIDDEN = 128
IN_RAW = 6
IN_PAD = 8          # contraction dim of layer 1, padded to the f32 sublane tile
OUT_RAW = 75
OUT_PAD = 128       # lane-dense padded output width


def _round_up(x, m):
    return ((x + m - 1) // m) * m


def _mlp_kernel(x_ref,
                w1_ref, b1_ref,
                w2_ref, b2_ref,
                w3_ref, b3_ref,
                w4_ref, b4_ref,
                w5_ref, b5_ref,
                w6_ref, b6_ref,
                o_ref):
    def dense(h_bf16, w_ref, b_ref, relu):
        # MXU matmul on bf16 inputs, f32 accumulation.
        acc = jnp.dot(h_bf16, w_ref[...], preferred_element_type=jnp.float32)
        acc = acc + b_ref[...]          # (1, 128) bias broadcasts over sublanes
        if relu:
            acc = jnp.maximum(acc, 0.0)
        return acc

    h = dense(x_ref[...], w1_ref, b1_ref, relu=True).astype(jnp.bfloat16)
    h = dense(h, w2_ref, b2_ref, relu=True).astype(jnp.bfloat16)
    h = dense(h, w3_ref, b3_ref, relu=True).astype(jnp.bfloat16)
    h = dense(h, w4_ref, b4_ref, relu=True).astype(jnp.bfloat16)
    h = dense(h, w5_ref, b5_ref, relu=True).astype(jnp.bfloat16)
    out = dense(h, w6_ref, b6_ref, relu=False)     # final layer: no ReLU
    o_ref[...] = out.astype(o_ref.dtype)


def prepare_params(params):
    """Pad + cast torch-layout params for the kernel.

    params: list of (W (in,out) f32, b (out,) f32) with true (unpadded) shapes.
    Returns a flat list [w1, b1, ..., w6, b6] with:
      W1 padded (6->8) on the contraction dim, W6/b6 padded (75->128) on the
      output dim, weights in bf16, biases as (1, out_pad) f32.
    """
    flat = []
    for li, (w, b) in enumerate(params):
        fin, fout = w.shape
        fin_p = IN_PAD if li == 0 else fin
        fout_p = OUT_PAD if li == len(params) - 1 else fout
        wp = jnp.zeros((fin_p, fout_p), jnp.bfloat16)
        wp = wp.at[:fin, :fout].set(w.astype(jnp.bfloat16))
        bp = jnp.zeros((1, fout_p), jnp.float32)
        bp = bp.at[0, :fout].set(b.astype(jnp.float32))
        flat.extend([wp, bp])
    return flat


@functools.partial(jax.jit, static_argnames=("tile_b",))
def net_forward(x, params, tile_b=256):
    """x: (B, 6) float32; params: list of (W (in,out), b (out,)) f32 pairs."""
    B = x.shape[0]
    TB = min(tile_b, max(8, _round_up(B, 8)))
    B_pad = _round_up(B, TB)
    n_tiles = B_pad // TB

    # Pad the input to (B_pad, 8) and cast to bf16 for the MXU.
    xp = jnp.zeros((B_pad, IN_PAD), jnp.bfloat16)
    xp = xp.at[:B, :IN_RAW].set(x.astype(jnp.bfloat16))

    flat_params = prepare_params(params)

    in_specs = [pl.BlockSpec((TB, IN_PAD), lambda i: (i, 0))]
    for p in flat_params:
        # Weights / biases: full blocks, resident in VMEM across the whole grid.
        in_specs.append(pl.BlockSpec(p.shape, lambda i: (0, 0)))
    out_specs = pl.BlockSpec((TB, OUT_PAD), lambda i: (i, 0))

    flops = 2 * B_pad * (IN_PAD * HIDDEN + 4 * HIDDEN * HIDDEN + HIDDEN * OUT_PAD)
    bytes_accessed = (xp.size * xp.dtype.itemsize
                      + sum(p.size * p.dtype.itemsize for p in flat_params)
                      + B_pad * OUT_PAD * 4)

    out = pl.pallas_call(
        _mlp_kernel,
        out_shape=jax.ShapeDtypeStruct((B_pad, OUT_PAD), jnp.float32),
        grid=(n_tiles,),
        in_specs=in_specs,
        out_specs=out_specs,
        compiler_params=pltpu.CompilerParams(
            dimension_semantics=("parallel",)),
        cost_estimate=pl.CostEstimate(
            flops=flops, transcendentals=0, bytes_accessed=bytes_accessed),
    )(xp, *flat_params)

    return out[:B, :OUT_RAW]


def init_params(key):
    """Deterministic init matching torch.nn.Linear default U(-1/sqrt(fan_in), +)."""
    dims = [(IN_RAW, HIDDEN), (HIDDEN, HIDDEN), (HIDDEN, HIDDEN),
            (HIDDEN, HIDDEN), (HIDDEN, HIDDEN), (HIDDEN, OUT_RAW)]
    params = []
    for i, (fan_in, fan_out) in enumerate(dims):
        kw, kb = jax.random.split(jax.random.fold_in(key, i))
        bound = 1.0 / (fan_in ** 0.5)
        # store W as (in, out) so the kernel does x @ W  (== torch's x @ W.T)
        w = jax.random.uniform(kw, (fan_in, fan_out), jnp.float32, -bound, bound)
        b = jax.random.uniform(kb, (fan_out,), jnp.float32, -bound, bound)
        params.append((w, b))
    return params


def ref_forward(x, params, use_bf16=True):
    """Pure-JAX reference; use_bf16=True mirrors the kernel's MXU numerics."""
    h = x
    n = len(params)
    for i, (w, b) in enumerate(params):
        if use_bf16:
            h = jnp.dot(h.astype(jnp.bfloat16), w.astype(jnp.bfloat16),
                        preferred_element_type=jnp.float32) + b
        else:
            h = h @ w + b
        if i < n - 1:
            h = jnp.maximum(h, 0.0)
    return h


if __name__ == "__main__":
    key = jax.random.PRNGKey(0)
    kx, kp = jax.random.split(key)

    B = 8
    x = jax.random.normal(kx, (B, IN_RAW), jnp.float32)
    params = init_params(kp)

    out = net_forward(x, params)
    jax.block_until_ready(out)
    assert out.shape == (B, OUT_RAW)

    # Reference with matching bf16-in / f32-accumulate numerics.
    ref_bf16 = ref_forward(x, params, use_bf16=True)
    assert jnp.allclose(out, ref_bf16, atol=2e-2, rtol=2e-2), "mismatch vs bf16 ref"

    # Sanity vs the full-f32 torch-equivalent reference (looser: bf16 MXU inputs).
    ref_f32 = ref_forward(x, params, use_bf16=False)
    assert jnp.max(jnp.abs(out - ref_f32)) < 5e-2, "mismatch vs f32 ref"

    print("KERNEL_OK")
</pallas_src>

<mosaic_0001>
module attributes {stable_mosaic.version = 11 : i64} {
  func.func @_mlp_kernel(%arg0: i32, %arg1: memref<8x8xbf16, #tpu.memory_space<vmem>>, %arg2: memref<8x128xbf16, #tpu.memory_space<vmem>>, %arg3: memref<1x128xf32, #tpu.memory_space<vmem>>, %arg4: memref<128x128xbf16, #tpu.memory_space<vmem>>, %arg5: memref<1x128xf32, #tpu.memory_space<vmem>>, %arg6: memref<128x128xbf16, #tpu.memory_space<vmem>>, %arg7: memref<1x128xf32, #tpu.memory_space<vmem>>, %arg8: memref<128x128xbf16, #tpu.memory_space<vmem>>, %arg9: memref<1x128xf32, #tpu.memory_space<vmem>>, %arg10: memref<128x128xbf16, #tpu.memory_space<vmem>>, %arg11: memref<1x128xf32, #tpu.memory_space<vmem>>, %arg12: memref<128x128xbf16, #tpu.memory_space<vmem>>, %arg13: memref<1x128xf32, #tpu.memory_space<vmem>>, %arg14: memref<8x128xf32, #tpu.memory_space<vmem>>) attributes {dimension_semantics = [#tpu.dimension_semantics<parallel>], iteration_bounds = array<i64: 1>, scalar_prefetch = 0 : i64, scratch_operands = 0 : i64, tpu.core_type = #tpu.core_type<tc>, window_params = [{transform_indices = @transform_0, window_bounds = array<i64: 8, 8>}, {pipeline_mode = #tpu.pipeline_mode<synchronous>, transform_indices = @transform_1, window_bounds = array<i64: 8, 128>}, {pipeline_mode = #tpu.pipeline_mode<synchronous>, transform_indices = @transform_2, window_bounds = array<i64: 1, 128>}, {pipeline_mode = #tpu.pipeline_mode<synchronous>, transform_indices = @transform_3, window_bounds = array<i64: 128, 128>}, {pipeline_mode = #tpu.pipeline_mode<synchronous>, transform_indices = @transform_4, window_bounds = array<i64: 1, 128>}, {pipeline_mode = #tpu.pipeline_mode<synchronous>, transform_indices = @transform_5, window_bounds = array<i64: 128, 128>}, {pipeline_mode = #tpu.pipeline_mode<synchronous>, transform_indices = @transform_6, window_bounds = array<i64: 1, 128>}, {pipeline_mode = #tpu.pipeline_mode<synchronous>, transform_indices = @transform_7, window_bounds = array<i64: 128, 128>}, {pipeline_mode = #tpu.pipeline_mode<synchronous>, transform_indices = @transform_8, window_bounds = array<i64: 1, 128>}, {pipeline_mode = #tpu.pipeline_mode<synchronous>, transform_indices = @transform_9, window_bounds = array<i64: 128, 128>}, {pipeline_mode = #tpu.pipeline_mode<synchronous>, transform_indices = @transform_10, window_bounds = array<i64: 1, 128>}, {pipeline_mode = #tpu.pipeline_mode<synchronous>, transform_indices = @transform_11, window_bounds = array<i64: 128, 128>}, {pipeline_mode = #tpu.pipeline_mode<synchronous>, transform_indices = @transform_12, window_bounds = array<i64: 1, 128>}, {transform_indices = @transform_13, window_bounds = array<i64: 8, 128>}]} {
    %c0 = arith.constant 0 : index
    %c0_0 = arith.constant 0 : index
    %0 = vector.load %arg1[%c0, %c0_0] : memref<8x8xbf16, #tpu.memory_space<vmem>>, vector<8x8xbf16>
    %c0_1 = arith.constant 0 : index
    %c0_2 = arith.constant 0 : index
    %1 = vector.load %arg2[%c0_1, %c0_2] : memref<8x128xbf16, #tpu.memory_space<vmem>>, vector<8x128xbf16>
    %cst = arith.constant dense<0.000000e+00> : vector<8x128xf32>
    %2 = tpu.matmul %0, %1, %cst {dimension_numbers = #tpu.dot_dimension_numbers<[1], [0], [0], [1], [0, 0, 1, 1], [], []>} : vector<8x8xbf16>, vector<8x128xbf16>, vector<8x128xf32> -> vector<8x128xf32>
    %c0_3 = arith.constant 0 : index
    %c0_4 = arith.constant 0 : index
    %3 = vector.load %arg3[%c0_3, %c0_4] : memref<1x128xf32, #tpu.memory_space<vmem>>, vector<1x128xf32>
    %4 = vector.broadcast %3 : vector<1x128xf32> to vector<8x128xf32>
    %5 = arith.addf %2, %4 : vector<8x128xf32>
    %cst_5 = arith.constant 0.000000e+00 : f32
    %6 = vector.broadcast %cst_5 : f32 to vector<8x128xf32>
    %7 = arith.maximumf %5, %6 : vector<8x128xf32>
    %8 = arith.truncf %7 : vector<8x128xf32> to vector<8x128xbf16>
    %c0_6 = arith.constant 0 : index
    %c0_7 = arith.constant 0 : index
    %9 = vector.load %arg4[%c0_6, %c0_7] : memref<128x128xbf16, #tpu.memory_space<vmem>>, vector<128x128xbf16>
    %cst_8 = arith.constant dense<0.000000e+00> : vector<8x128xf32>
    %10 = tpu.matmul %8, %9, %cst_8 {dimension_numbers = #tpu.dot_dimension_numbers<[1], [0], [0], [1], [0, 0, 1, 1], [], []>} : vector<8x128xbf16>, vector<128x128xbf16>, vector<8x128xf32> -> vector<8x128xf32>
    %c0_9 = arith.constant 0 : index
    %c0_10 = arith.constant 0 : index
    %11 = vector.load %arg5[%c0_9, %c0_10] : memref<1x128xf32, #tpu.memory_space<vmem>>, vector<1x128xf32>
    %12 = vector.broadcast %11 : vector<1x128xf32> to vector<8x128xf32>
    %13 = arith.addf %10, %12 : vector<8x128xf32>
    %cst_11 = arith.constant 0.000000e+00 : f32
    %14 = vector.broadcast %cst_11 : f32 to vector<8x128xf32>
    %15 = arith.maximumf %13, %14 : vector<8x128xf32>
    %16 = arith.truncf %15 : vector<8x128xf32> to vector<8x128xbf16>
    %c0_12 = arith.constant 0 : index
    %c0_13 = arith.constant 0 : index
    %17 = vector.load %arg6[%c0_12, %c0_13] : memref<128x128xbf16, #tpu.memory_space<vmem>>, vector<128x128xbf16>
    %cst_14 = arith.constant dense<0.000000e+00> : vector<8x128xf32>
    %18 = tpu.matmul %16, %17, %cst_14 {dimension_numbers = #tpu.dot_dimension_numbers<[1], [0], [0], [1], [0, 0, 1, 1], [], []>} : vector<8x128xbf16>, vector<128x128xbf16>, vector<8x128xf32> -> vector<8x128xf32>
    %c0_15 = arith.constant 0 : index
    %c0_16 = arith.constant 0 : index
    %19 = vector.load %arg7[%c0_15, %c0_16] : memref<1x128xf32, #tpu.memory_space<vmem>>, vector<1x128xf32>
    %20 = vector.broadcast %19 : vector<1x128xf32> to vector<8x128xf32>
    %21 = arith.addf %18, %20 : vector<8x128xf32>
    %cst_17 = arith.constant 0.000000e+00 : f32
    %22 = vector.broadcast %cst_17 : f32 to vector<8x128xf32>
    %23 = arith.maximumf %21, %22 : vector<8x128xf32>
    %24 = arith.truncf %23 : vector<8x128xf32> to vector<8x128xbf16>
    %c0_18 = arith.constant 0 : index
    %c0_19 = arith.constant 0 : index
    %25 = vector.load %arg8[%c0_18, %c0_19] : memref<128x128xbf16, #tpu.memory_space<vmem>>, vector<128x128xbf16>
    %cst_20 = arith.constant dense<0.000000e+00> : vector<8x128xf32>
    %26 = tpu.matmul %24, %25, %cst_20 {dimension_numbers = #tpu.dot_dimension_numbers<[1], [0], [0], [1], [0, 0, 1, 1], [], []>} : vector<8x128xbf16>, vector<128x128xbf16>, vector<8x128xf32> -> vector<8x128xf32>
    %c0_21 = arith.constant 0 : index
    %c0_22 = arith.constant 0 : index
    %27 = vector.load %arg9[%c0_21, %c0_22] : memref<1x128xf32, #tpu.memory_space<vmem>>, vector<1x128xf32>
    %28 = vector.broadcast %27 : vector<1x128xf32> to vector<8x128xf32>
    %29 = arith.addf %26, %28 : vector<8x128xf32>
    %cst_23 = arith.constant 0.000000e+00 : f32
    %30 = vector.broadcast %cst_23 : f32 to vector<8x128xf32>
    %31 = arith.maximumf %29, %30 : vector<8x128xf32>
    %32 = arith.truncf %31 : vector<8x128xf32> to vector<8x128xbf16>
    %c0_24 = arith.constant 0 : index
    %c0_25 = arith.constant 0 : index
    %33 = vector.load %arg10[%c0_24, %c0_25] : memref<128x128xbf16, #tpu.memory_space<vmem>>, vector<128x128xbf16>
    %cst_26 = arith.constant dense<0.000000e+00> : vector<8x128xf32>
    %34 = tpu.matmul %32, %33, %cst_26 {dimension_numbers = #tpu.dot_dimension_numbers<[1], [0], [0], [1], [0, 0, 1, 1], [], []>} : vector<8x128xbf16>, vector<128x128xbf16>, vector<8x128xf32> -> vector<8x128xf32>
    %c0_27 = arith.constant 0 : index
    %c0_28 = arith.constant 0 : index
    %35 = vector.load %arg11[%c0_27, %c0_28] : memref<1x128xf32, #tpu.memory_space<vmem>>, vector<1x128xf32>
    %36 = vector.broadcast %35 : vector<1x128xf32> to vector<8x128xf32>
    %37 = arith.addf %34, %36 : vector<8x128xf32>
    %cst_29 = arith.constant 0.000000e+00 : f32
    %38 = vector.broadcast %cst_29 : f32 to vector<8x128xf32>
    %39 = arith.maximumf %37, %38 : vector<8x128xf32>
    %40 = arith.truncf %39 : vector<8x128xf32> to vector<8x128xbf16>
    %c0_30 = arith.constant 0 : index
    %c0_31 = arith.constant 0 : index
    %41 = vector.load %arg12[%c0_30, %c0_31] : memref<128x128xbf16, #tpu.memory_space<vmem>>, vector<128x128xbf16>
    %cst_32 = arith.constant dense<0.000000e+00> : vector<8x128xf32>
    %42 = tpu.matmul %40, %41, %cst_32 {dimension_numbers = #tpu.dot_dimension_numbers<[1], [0], [0], [1], [0, 0, 1, 1], [], []>} : vector<8x128xbf16>, vector<128x128xbf16>, vector<8x128xf32> -> vector<8x128xf32>
    %c0_33 = arith.constant 0 : index
    %c0_34 = arith.constant 0 : index
    %43 = vector.load %arg13[%c0_33, %c0_34] : memref<1x128xf32, #tpu.memory_space<vmem>>, vector<1x128xf32>
    %44 = vector.broadcast %43 : vector<1x128xf32> to vector<8x128xf32>
    %45 = arith.addf %42, %44 : vector<8x128xf32>
    %c0_35 = arith.constant 0 : index
    %c0_36 = arith.constant 0 : index
    %46 = vector.load %arg14[%c0_35, %c0_36] : memref<8x128xf32, #tpu.memory_space<vmem>>, vector<8x128xf32>
    tpu.vector_store %arg14[%c0_35, %c0_36], %45 {strides = array<i32>} : memref<8x128xf32, #tpu.memory_space<vmem>>, vector<8x128xf32>,
    return
  }
  func.func @transform_0(%arg0: i32) -> (i32, i32) {
    %c0_i32 = arith.constant 0 : i32
    %c0_i32_0 = arith.constant 0 : i32
    return %arg0, %c0_i32 : i32, i32
  }
  func.func @transform_1(%arg0: i32) -> (i32, i32) {
    %c0_i32 = arith.constant 0 : i32
    %c0_i32_0 = arith.constant 0 : i32
    %c0_i32_1 = arith.constant 0 : i32
    return %c0_i32, %c0_i32_0 : i32, i32
  }
  func.func @transform_2(%arg0: i32) -> (i32, i32) {
    %c0_i32 = arith.constant 0 : i32
    %c0_i32_0 = arith.constant 0 : i32
    %c0_i32_1 = arith.constant 0 : i32
    return %c0_i32, %c0_i32_0 : i32, i32
  }
  func.func @transform_3(%arg0: i32) -> (i32, i32) {
    %c0_i32 = arith.constant 0 : i32
    %c0_i32_0 = arith.constant 0 : i32
    %c0_i32_1 = arith.constant 0 : i32
    return %c0_i32, %c0_i32_0 : i32, i32
  }
  func.func @transform_4(%arg0: i32) -> (i32, i32) {
    %c0_i32 = arith.constant 0 : i32
    %c0_i32_0 = arith.constant 0 : i32
    %c0_i32_1 = arith.constant 0 : i32
    return %c0_i32, %c0_i32_0 : i32, i32
  }
  func.func @transform_5(%arg0: i32) -> (i32, i32) {
    %c0_i32 = arith.constant 0 : i32
    %c0_i32_0 = arith.constant 0 : i32
    %c0_i32_1 = arith.constant 0 : i32
    return %c0_i32, %c0_i32_0 : i32, i32
  }
  func.func @transform_6(%arg0: i32) -> (i32, i32) {
    %c0_i32 = arith.constant 0 : i32
    %c0_i32_0 = arith.constant 0 : i32
    %c0_i32_1 = arith.constant 0 : i32
    return %c0_i32, %c0_i32_0 : i32, i32
  }
  func.func @transform_7(%arg0: i32) -> (i32, i32) {
    %c0_i32 = arith.constant 0 : i32
    %c0_i32_0 = arith.constant 0 : i32
    %c0_i32_1 = arith.constant 0 : i32
    return %c0_i32, %c0_i32_0 : i32, i32
  }
  func.func @transform_8(%arg0: i32) -> (i32, i32) {
    %c0_i32 = arith.constant 0 : i32
    %c0_i32_0 = arith.constant 0 : i32
    %c0_i32_1 = arith.constant 0 : i32
    return %c0_i32, %c0_i32_0 : i32, i32
  }
  func.func @transform_9(%arg0: i32) -> (i32, i32) {
    %c0_i32 = arith.constant 0 : i32
    %c0_i32_0 = arith.constant 0 : i32
    %c0_i32_1 = arith.constant 0 : i32
    return %c0_i32, %c0_i32_0 : i32, i32
  }
  func.func @transform_10(%arg0: i32) -> (i32, i32) {
    %c0_i32 = arith.constant 0 : i32
    %c0_i32_0 = arith.constant 0 : i32
    %c0_i32_1 = arith.constant 0 : i32
    return %c0_i32, %c0_i32_0 : i32, i32
  }
  func.func @transform_11(%arg0: i32) -> (i32, i32) {
    %c0_i32 = arith.constant 0 : i32
    %c0_i32_0 = arith.constant 0 : i32
    %c0_i32_1 = arith.constant 0 : i32
    return %c0_i32, %c0_i32_0 : i32, i32
  }
  func.func @transform_12(%arg0: i32) -> (i32, i32) {
    %c0_i32 = arith.constant 0 : i32
    %c0_i32_0 = arith.constant 0 : i32
    %c0_i32_1 = arith.constant 0 : i32
    return %c0_i32, %c0_i32_0 : i32, i32
  }
  func.func @transform_13(%arg0: i32) -> (i32, i32) {
    %c0_i32 = arith.constant 0 : i32
    %c0_i32_0 = arith.constant 0 : i32
    return %arg0, %c0_i32 : i32, i32
  }
}

</mosaic_0001>

<llo_original>
// kernel: net_forward.1
$region0: #{net_forward.1}
  #allocation0 [shape = 'u32[]', space=smem, size = 0x4, offset = 0x4, fixed_abs, tag = 'smem constant byte address 0x4 - core index']
  #allocation1 [shape = 'u32[144,128]{1,0:T(1,128)}', space=vmem, size = 0x12000, scoped, tag = 'internal scratch']
  %s0 = inlined_call_operand.vmem [shape: bf16[8,8], index: 0, kind: input, shape index: {}]
  %s1 = inlined_call_operand.vmem [shape: bf16[8,128], index: 1, kind: input, shape index: {}]
  %s2 = inlined_call_operand.vmem [shape: f32[1,128], index: 2, kind: input, shape index: {}]
  %s3 = inlined_call_operand.vmem [shape: bf16[128,128], index: 3, kind: input, shape index: {}]
  %s4 = inlined_call_operand.vmem [shape: f32[1,128], index: 4, kind: input, shape index: {}]
  %s5 = inlined_call_operand.vmem [shape: bf16[128,128], index: 5, kind: input, shape index: {}]
  %s6 = inlined_call_operand.vmem [shape: f32[1,128], index: 6, kind: input, shape index: {}]
  %s7 = inlined_call_operand.vmem [shape: bf16[128,128], index: 7, kind: input, shape index: {}]
  %s8 = inlined_call_operand.vmem [shape: f32[1,128], index: 8, kind: input, shape index: {}]
  %s9 = inlined_call_operand.vmem [shape: bf16[128,128], index: 9, kind: input, shape index: {}]
  %s10 = inlined_call_operand.vmem [shape: f32[1,128], index: 10, kind: input, shape index: {}]
  %s11 = inlined_call_operand.vmem [shape: bf16[128,128], index: 11, kind: input, shape index: {}]
  %s12 = inlined_call_operand.vmem [shape: f32[1,128], index: 12, kind: input, shape index: {}]
  %s13 = inlined_call_operand.hbm [shape: f32[8,128], index: 13, kind: output, shape index: {}]
  %s14 = sld [smem:[#allocation0]]
  $region62: #{net_forward.1} parent=0
    _
  %s16 = ssub.s32 1, %s14
  %s17 = scalar_select 0, %s16, %s14
  $region1: #{net_forward.1} parent=0
    #allocation2 [shape = 'u8[4096]{0}', space=vmem, size = 0x1000, scoped, tag = 'output window, operand 0, single buffered']
    #allocation3 [shape = 's32[1]{0}', space=sflag, size = 0x4, scoped, tag = 'scoped memory for net_forward.1']
    %18 = vsyncpa [#allocation3], 0
    // Predicated region
    $region2: #{net_forward.1} parent=1 // pred_check
      _
    $region3: #{net_forward.1} parent=1 // pred_check_branch
      %20 = sbr.rel (0) target = $region5
    $region4: #{net_forward.1} parent=1 // pred_region
      _
    $region5: #{net_forward.1} parent=1 // pred_fallthru
      _
    // Predicated region
    $region6: #{net_forward.1} parent=1 // pred_check
      _
    $region7: #{net_forward.1} parent=1 // pred_check_branch
      %22 = sbr.rel (0) target = $region9
    $region8: #{net_forward.1} parent=1 // pred_region
      _
    $region9: #{net_forward.1} parent=1 // pred_fallthru
      _
    // Predicated region
    $region10: #{net_forward.1} parent=1 // pred_check
      _
    $region11: #{net_forward.1} parent=1 // pred_check_branch
      %24 = sbr.rel (0) target = $region13
    $region12: #{net_forward.1} parent=1 // pred_region
      _
    $region13: #{net_forward.1} parent=1 // pred_fallthru
      _
    // Predicated region
    $region14: #{net_forward.1} parent=1 // pred_check
      _
    $region15: #{net_forward.1} parent=1 // pred_check_branch
      %26 = sbr.rel (0) target = $region17
    $region16: #{net_forward.1} parent=1 // pred_region
      _
    $region17: #{net_forward.1} parent=1 // pred_fallthru
      _
    // Predicated region
    $region18: #{net_forward.1} parent=1 // pred_check
      _
    $region19: #{net_forward.1} parent=1 // pred_check_branch
      %28 = sbr.rel (0) target = $region21
    $region20: #{net_forward.1} parent=1 // pred_region
      _
    $region21: #{net_forward.1} parent=1 // pred_fallthru
      _
    // Predicated region
    $region22: #{net_forward.1} parent=1 // pred_check
      _
    $region23: #{net_forward.1} parent=1 // pred_check_branch
      %30 = sbr.rel (0) target = $region25
    $region24: #{net_forward.1} parent=1 // pred_region
      _
    $region25: #{net_forward.1} parent=1 // pred_fallthru
      _
    // Predicated region
    $region26: #{net_forward.1} parent=1 // pred_check
      _
    $region27: #{net_forward.1} parent=1 // pred_check_branch
      %32 = sbr.rel (0) target = $region29
    $region28: #{net_forward.1} parent=1 // pred_region
      _
    $region29: #{net_forward.1} parent=1 // pred_fallthru
      _
    // Predicated region
    $region30: #{net_forward.1} parent=1 // pred_check
      _
    $region31: #{net_forward.1} parent=1 // pred_check_branch
      %34 = sbr.rel (0) target = $region33
    $region32: #{net_forward.1} parent=1 // pred_region
      _
    $region33: #{net_forward.1} parent=1 // pred_fallthru
      _
    // Predicated region
    $region34: #{net_forward.1} parent=1 // pred_check
      _
    $region35: #{net_forward.1} parent=1 // pred_check_branch
      %36 = sbr.rel (0) target = $region37
    $region36: #{net_forward.1} parent=1 // pred_region
      _
    $region37: #{net_forward.1} parent=1 // pred_fallthru
      _
    // Predicated region
    $region38: #{net_forward.1} parent=1 // pred_check
      _
    $region39: #{net_forward.1} parent=1 // pred_check_branch
      %38 = sbr.rel (0) target = $region41
    $region40: #{net_forward.1} parent=1 // pred_region
      _
    $region41: #{net_forward.1} parent=1 // pred_fallthru
      _
    // Predicated region
    $region42: #{net_forward.1} parent=1 // pred_check
      _
    $region43: #{net_forward.1} parent=1 // pred_check_branch
      %40 = sbr.rel (0) target = $region45
    $region44: #{net_forward.1} parent=1 // pred_region
      _
    $region45: #{net_forward.1} parent=1 // pred_fallthru
      _
    // Predicated region
    $region46: #{net_forward.1} parent=1 // pred_check
      _
    $region47: #{net_forward.1} parent=1 // pred_check_branch
      %42 = sbr.rel (0) target = $region49
    $region48: #{net_forward.1} parent=1 // pred_region
      _
    $region49: #{net_forward.1} parent=1 // pred_fallthru
      _
    // Predicated region
    $region50: #{net_forward.1} parent=1 // pred_check
      _
    $region51: #{net_forward.1} parent=1 // pred_check_branch
      %44 = sbr.rel (0) target = $region53
    $region52: #{net_forward.1} parent=1 // pred_region
      _
    $region53: #{net_forward.1} parent=1 // pred_fallthru
      _
    %v46 = vld [vmem:[%s0] sm:$0xf]
    %v47 = vld [vmem:[%s1] sm:$0xf]
    %v48 = vld [vmem:[%s2] sm:$0x1]
    %v50 = vlaneseq
    %v51 = vshrl.u32 %v50, 7
    %v52 = vsub.s32 0, %v51
    %v53 = vrot.slane %v48, %v52
    %vm55 = vcmask 64512
    %v57 = vsel %vm55, %v46, 0
    %vm59 = vcmask 1043456
    %v61 = vsel %vm59, %v47, 0
    %63 = vmatprep.subr.bf16.mxu0 0
    %64 = vmatpush1.bf16.msra.mxu0 0
    %65 = vmatprep.subr.bf16.mxu0 0
    %66 = vmatpush1.bf16.msra.mxu0 0
    %67 = vmatprep.subr.bf16.mxu0 0
    %68 = vmatpush1.bf16.msra.mxu0 0
    %69 = vmatprep.subr.bf16.mxu0 0
    %70 = vmatpush1.bf16.msra.mxu0 0
    %71 = vmatprep.subr.bf16.mxu0 0
    %72 = vmatpush1.bf16.msra.mxu0 0
    %73 = vmatprep.subr.bf16.mxu0 0
    %74 = vmatpush1.bf16.msra.mxu0 0
    %75 = vmatprep.subr.bf16.mxu0 0
    %76 = vmatpush1.bf16.msra.mxu0 0
    %77 = vmatprep.subr.bf16.mxu0 0
    %78 = vmatpush1.bf16.msra.mxu0 %v61
    %79 = vmatprep.subr.bf16.mxu0 0
    %80 = vmatpush2.bf16.msra.mxu0 0
    %81 = vmatprep.subr.bf16.mxu0 0
    %82 = vmatpush2.bf16.msra.mxu0 0
    %83 = vmatprep.subr.bf16.mxu0 0
    %84 = vmatpush2.bf16.msra.mxu0 0
    %85 = vmatprep.subr.bf16.mxu0 0
    %86 = vmatpush2.bf16.msra.mxu0 0
    %87 = vmatprep.subr.bf16.mxu0 0
    %88 = vmatpush2.bf16.msra.mxu0 0
    %89 = vmatprep.subr.bf16.mxu0 0
    %90 = vmatpush2.bf16.msra.mxu0 0
    %91 = vmatprep.subr.bf16.mxu0 0
    %92 = vmatpush2.bf16.msra.mxu0 0
    %93 = vmatprep.subr.bf16.mxu0 0
    %94 = vmatpush2.bf16.msra.mxu0 0
    %95 = vmatprep.mubr.bf16.mxu0 0
    %96 = vmatmul.mubr.bf16.gmra.mxu0 %v57
    %v97 = vpop.f32.mrf.mxu0
    %v98 = vadd.f32 %v53, %v97
    %v99 = vpop.f32.mrf.mxu0
    %v100 = vpop.f32.mrf.mxu0
    %v101 = vpop.f32.mrf.mxu0
    %102 = vdwg.mxu0
    %v103 = vmax.f32 %v98, 0.0
    %v104 = vpack.c.bf16 %v103, %v103
    %v105 = vld [vmem:[%s3] sm:$0xf]
    %v106 = vld [vmem:[%s3 + $0x4] sm:$0xf]
    %v107 = vld [vmem:[%s3 + $0x8] sm:$0xf]
    %v108 = vld [vmem:[%s3 + $0xc] sm:$0xf]
    %v109 = vld [vmem:[%s3 + $0x10] sm:$0xf]
    %v110 = vld [vmem:[%s3 + $0x14] sm:$0xf]
    %v111 = vld [vmem:[%s3 + $0x18] sm:$0xf]
    %v112 = vld [vmem:[%s3 + $0x1c] sm:$0xf]
    %v113 = vld [vmem:[%s3 + $0x20] sm:$0xf]
    %v114 = vld [vmem:[%s3 + $0x24] sm:$0xf]
    %v115 = vld [vmem:[%s3 + $0x28] sm:$0xf]
    %v116 = vld [vmem:[%s3 + $0x2c] sm:$0xf]
    %v117 = vld [vmem:[%s3 + $0x30] sm:$0xf]
    %v118 = vld [vmem:[%s3 + $0x34] sm:$0xf]
    %v119 = vld [vmem:[%s3 + $0x38] sm:$0xf]
    %v120 = vld [vmem:[%s3 + $0x3c] sm:$0xf]
    %v121 = vld [vmem:[%s4] sm:$0x1]
    %v123 = vlaneseq
    %v124 = vshrl.u32 %v123, 7
    %v125 = vsub.s32 0, %v124
    %v126 = vrot.slane %v121, %v125
    %v144 = vunpack.c.l.b16 %v105
    %v145 = vunpack.c.l.b16 %v106
    %v146 = vunpack.c.l.b16 %v107
    %v147 = vunpack.c.l.b16 %v108
    %v148 = vunpack.c.l.b16 %v109
    %v149 = vunpack.c.l.b16 %v110
    %v150 = vunpack.c.l.b16 %v111
    %v151 = vunpack.c.l.b16 %v112
    %v152 = vunpack.c.l.b16 %v113
    %v153 = vunpack.c.l.b16 %v114
    %v154 = vunpack.c.l.b16 %v115
    %v155 = vunpack.c.l.b16 %v116
    %v156 = vunpack.c.l.b16 %v117
    %v157 = vunpack.c.l.b16 %v118
    %v158 = vunpack.c.l.b16 %v119
    %v159 = vunpack.c.l.b16 %v120
    %v160 = vpack.c.b16 %v145, %v144
    %v161 = vpack.c.b16 %v147, %v146
    %v162 = vpack.c.b16 %v149, %v148
    %v163 = vpack.c.b16 %v151, %v150
    %v164 = vpack.c.b16 %v153, %v152
    %v165 = vpack.c.b16 %v155, %v154
    %v166 = vpack.c.b16 %v157, %v156
    %v167 = vpack.c.b16 %v159, %v158
    %176 = vmatprep.subr.bf16.mxu0 0
    %177 = vmatpush1.bf16.msra.mxu0 %v167
    %178 = vmatprep.subr.bf16.mxu0 0
    %179 = vmatpush1.bf16.msra.mxu0 %v166
    %180 = vmatprep.subr.bf16.mxu0 0
    %181 = vmatpush1.bf16.msra.mxu0 %v165
    %182 = vmatprep.subr.bf16.mxu0 0
    %183 = vmatpush1.bf16.msra.mxu0 %v164
    %184 = vmatprep.subr.bf16.mxu0 0
    %185 = vmatpush1.bf16.msra.mxu0 %v163
    %186 = vmatprep.subr.bf16.mxu0 0
    %187 = vmatpush1.bf16.msra.mxu0 %v162
    %188 = vmatprep.subr.bf16.mxu0 0
    %189 = vmatpush1.bf16.msra.mxu0 %v161
    %190 = vmatprep.subr.bf16.mxu0 0
    %191 = vmatpush1.bf16.msra.mxu0 %v160
    %192 = vmatprep.subr.bf16.mxu0 0
    %193 = vmatpush2.bf16.msra.mxu0 0
    %194 = vmatprep.subr.bf16.mxu0 0
    %195 = vmatpush2.bf16.msra.mxu0 0
    %196 = vmatprep.subr.bf16.mxu0 0
    %197 = vmatpush2.bf16.msra.mxu0 0
    %198 = vmatprep.subr.bf16.mxu0 0
    %199 = vmatpush2.bf16.msra.mxu0 0
    %200 = vmatprep.subr.bf16.mxu0 0
    %201 = vmatpush2.bf16.msra.mxu0 0
    %202 = vmatprep.subr.bf16.mxu0 0
    %203 = vmatpush2.bf16.msra.mxu0 0
    %204 = vmatprep.subr.bf16.mxu0 0
    %205 = vmatpush2.bf16.msra.mxu0 0
    %206 = vmatprep.subr.bf16.mxu0 0
    %207 = vmatpush2.bf16.msra.mxu0 0
    %208 = vmatprep.mubr.bf16.mxu0 0
    %209 = vmatmul.mubr.bf16.gmra.mxu0 %v104
    %v210 = vpop.f32.mrf.mxu0
    %v211 = vadd.f32 %v126, %v210
    %v212 = vpop.f32.mrf.mxu0
    %v213 = vpop.f32.mrf.mxu0
    %v214 = vpop.f32.mrf.mxu0
    %215 = vdwg.mxu0
    %v216 = vmax.f32 %v211, 0.0
    %v217 = vpack.c.bf16 %v216, %v216
    %v218 = vld [vmem:[%s5] sm:$0xf]
    %v219 = vld [vmem:[%s5 + $0x4] sm:$0xf]
    %v220 = vld [vmem:[%s5 + $0x8] sm:$0xf]
    %v221 = vld [vmem:[%s5 + $0xc] sm:$0xf]
    %v222 = vld [vmem:[%s5 + $0x10] sm:$0xf]
    %v223 = vld [vmem:[%s5 + $0x14] sm:$0xf]
    %v224 = vld [vmem:[%s5 + $0x18] sm:$0xf]
    %v225 = vld [vmem:[%s5 + $0x1c] sm:$0xf]
    %v226 = vld [vmem:[%s5 + $0x20] sm:$0xf]
    %v227 = vld [vmem:[%s5 + $0x24] sm:$0xf]
    %v228 = vld [vmem:[%s5 + $0x28] sm:$0xf]
    %v229 = vld [vmem:[%s5 + $0x2c] sm:$0xf]
    %v230 = vld [vmem:[%s5 + $0x30] sm:$0xf]
    %v231 = vld [vmem:[%s5 + $0x34] sm:$0xf]
    %v232 = vld [vmem:[%s5 + $0x38] sm:$0xf]
    %v233 = vld [vmem:[%s5 + $0x3c] sm:$0xf]
    %v234 = vld [vmem:[%s6] sm:$0x1]
    %v236 = vlaneseq
    %v237 = vshrl.u32 %v236, 7
    %v238 = vsub.s32 0, %v237
    %v239 = vrot.slane %v234, %v238
    %v257 = vunpack.c.l.b16 %v218
    %v258 = vunpack.c.l.b16 %v219
    %v259 = vunpack.c.l.b16 %v220
    %v260 = vunpack.c.l.b16 %v221
    %v261 = vunpack.c.l.b16 %v222
    %v262 = vunpack.c.l.b16 %v223
    %v263 = vunpack.c.l.b16 %v224
    %v264 = vunpack.c.l.b16 %v225
    %v265 = vunpack.c.l.b16 %v226
    %v266 = vunpack.c.l.b16 %v227
    %v267 = vunpack.c.l.b16 %v228
    %v268 = vunpack.c.l.b16 %v229
    %v269 = vunpack.c.l.b16 %v230
    %v270 = vunpack.c.l.b16 %v231
    %v271 = vunpack.c.l.b16 %v232
    %v272 = vunpack.c.l.b16 %v233
    %v273 = vpack.c.b16 %v258, %v257
    %v274 = vpack.c.b16 %v260, %v259
    %v275 = vpack.c.b16 %v262, %v261
    %v276 = vpack.c.b16 %v264, %v263
    %v277 = vpack.c.b16 %v266, %v265
    %v278 = vpack.c.b16 %v268, %v267
    %v279 = vpack.c.b16 %v270, %v269
    %v280 = vpack.c.b16 %v272, %v271
    %289 = vmatprep.subr.bf16.mxu0 0
    %290 = vmatpush1.bf16.msra.mxu0 %v280
    %291 = vmatprep.subr.bf16.mxu0 0
    %292 = vmatpush1.bf16.msra.mxu0 %v279
    %293 = vmatprep.subr.bf16.mxu0 0
    %294 = vmatpush1.bf16.msra.mxu0 %v278
    %295 = vmatprep.subr.bf16.mxu0 0
    %296 = vmatpush1.bf16.msra.mxu0 %v277
    %297 = vmatprep.subr.bf16.mxu0 0
    %298 = vmatpush1.bf16.msra.mxu0 %v276
    %299 = vmatprep.subr.bf16.mxu0 0
    %300 = vmatpush1.bf16.msra.mxu0 %v275
    %301 = vmatprep.subr.bf16.mxu0 0
    %302 = vmatpush1.bf16.msra.mxu0 %v274
    %303 = vmatprep.subr.bf16.mxu0 0
    %304 = vmatpush1.bf16.msra.mxu0 %v273
    %305 = vmatprep.subr.bf16.mxu0 0
    %306 = vmatpush2.bf16.msra.mxu0 0
    %307 = vmatprep.subr.bf16.mxu0 0
    %308 = vmatpush2.bf16.msra.mxu0 0
    %309 = vmatprep.subr.bf16.mxu0 0
    %310 = vmatpush2.bf16.msra.mxu0 0
    %311 = vmatprep.subr.bf16.mxu0 0
    %312 = vmatpush2.bf16.msra.mxu0 0
    %313 = vmatprep.subr.bf16.mxu0 0
    %314 = vmatpush2.bf16.msra.mxu0 0
    %315 = vmatprep.subr.bf16.mxu0 0
    %316 = vmatpush2.bf16.msra.mxu0 0
    %317 = vmatprep.subr.bf16.mxu0 0
    %318 = vmatpush2.bf16.msra.mxu0 0
    %319 = vmatprep.subr.bf16.mxu0 0
    %320 = vmatpush2.bf16.msra.mxu0 0
    %321 = vmatprep.mubr.bf16.mxu0 0
    %322 = vmatmul.mubr.bf16.gmra.mxu0 %v217
    %v323 = vpop.f32.mrf.mxu0
    %v324 = vadd.f32 %v239, %v323
    %v325 = vpop.f32.mrf.mxu0
    %v326 = vpop.f32.mrf.mxu0
    %v327 = vpop.f32.mrf.mxu0
    %328 = vdwg.mxu0
    %v329 = vmax.f32 %v324, 0.0
    %v330 = vpack.c.bf16 %v329, %v329
    %v331 = vld [vmem:[%s7] sm:$0xf]
    %v332 = vld [vmem:[%s7 + $0x4] sm:$0xf]
    %v333 = vld [vmem:[%s7 + $0x8] sm:$0xf]
    %v334 = vld [vmem:[%s7 + $0xc] sm:$0xf]
    %v335 = vld [vmem:[%s7 + $0x10] sm:$0xf]
    %v336 = vld [vmem:[%s7 + $0x14] sm:$0xf]
    %v337 = vld [vmem:[%s7 + $0x18] sm:$0xf]
    %v338 = vld [vmem:[%s7 + $0x1c] sm:$0xf]
    %v339 = vld [vmem:[%s7 + $0x20] sm:$0xf]
    %v340 = vld [vmem:[%s7 + $0x24] sm:$0xf]
    %v341 = vld [vmem:[%s7 + $0x28] sm:$0xf]
    %v342 = vld [vmem:[%s7 + $0x2c] sm:$0xf]
    %v343 = vld [vmem:[%s7 + $0x30] sm:$0xf]
    %v344 = vld [vmem:[%s7 + $0x34] sm:$0xf]
    %v345 = vld [vmem:[%s7 + $0x38] sm:$0xf]
    %v346 = vld [vmem:[%s7 + $0x3c] sm:$0xf]
    %v347 = vld [vmem:[%s8] sm:$0x1]
    %v349 = vlaneseq
    %v350 = vshrl.u32 %v349, 7
    %v351 = vsub.s32 0, %v350
    %v352 = vrot.slane %v347, %v351
    %v370 = vunpack.c.l.b16 %v331
    %v371 = vunpack.c.l.b16 %v332
    %v372 = vunpack.c.l.b16 %v333
    %v373 = vunpack.c.l.b16 %v334
    %v374 = vunpack.c.l.b16 %v335
    %v375 = vunpack.c.l.b16 %v336
    %v376 = vunpack.c.l.b16 %v337
    %v377 = vunpack.c.l.b16 %v338
    %v378 = vunpack.c.l.b16 %v339
    %v379 = vunpack.c.l.b16 %v340
    %v380 = vunpack.c.l.b16 %v341
    %v381 = vunpack.c.l.b16 %v342
    %v382 = vunpack.c.l.b16 %v343
    %v383 = vunpack.c.l.b16 %v344
    %v384 = vunpack.c.l.b16 %v345
    %v385 = vunpack.c.l.b16 %v346
    %v386 = vpack.c.b16 %v371, %v370
    %v387 = vpack.c.b16 %v373, %v372
    %v388 = vpack.c.b16 %v375, %v374
    %v389 = vpack.c.b16 %v377, %v376
    %v390 = vpack.c.b16 %v379, %v378
    %v391 = vpack.c.b16 %v381, %v380
    %v392 = vpack.c.b16 %v383, %v382
    %v393 = vpack.c.b16 %v385, %v384
    %402 = vmatprep.subr.bf16.mxu0 0
    %403 = vmatpush1.bf16.msra.mxu0 %v393
    %404 = vmatprep.subr.bf16.mxu0 0
    %405 = vmatpush1.bf16.msra.mxu0 %v392
    %406 = vmatprep.subr.bf16.mxu0 0
    %407 = vmatpush1.bf16.msra.mxu0 %v391
    %408 = vmatprep.subr.bf16.mxu0 0
    %409 = vmatpush1.bf16.msra.mxu0 %v390
    %410 = vmatprep.subr.bf16.mxu0 0
    %411 = vmatpush1.bf16.msra.mxu0 %v389
    %412 = vmatprep.subr.bf16.mxu0 0
    %413 = vmatpush1.bf16.msra.mxu0 %v388
    %414 = vmatprep.subr.bf16.mxu0 0
    %415 = vmatpush1.bf16.msra.mxu0 %v387
    %416 = vmatprep.subr.bf16.mxu0 0
    %417 = vmatpush1.bf16.msra.mxu0 %v386
    %418 = vmatprep.subr.bf16.mxu0 0
    %419 = vmatpush2.bf16.msra.mxu0 0
    %420 = vmatprep.subr.bf16.mxu0 0
    %421 = vmatpush2.bf16.msra.mxu0 0
    %422 = vmatprep.subr.bf16.mxu0 0
    %423 = vmatpush2.bf16.msra.mxu0 0
    %424 = vmatprep.subr.bf16.mxu0 0
    %425 = vmatpush2.bf16.msra.mxu0 0
    %426 = vmatprep.subr.bf16.mxu0 0
    %427 = vmatpush2.bf16.msra.mxu0 0
    %428 = vmatprep.subr.bf16.mxu0 0
    %429 = vmatpush2.bf16.msra.mxu0 0
    %430 = vmatprep.subr.bf16.mxu0 0
    %431 = vmatpush2.bf16.msra.mxu0 0
    %432 = vmatprep.subr.bf16.mxu0 0
    %433 = vmatpush2.bf16.msra.mxu0 0
    %434 = vmatprep.mubr.bf16.mxu0 0
    %435 = vmatmul.mubr.bf16.gmra.mxu0 %v330
    %v436 = vpop.f32.mrf.mxu0
    %v437 = vadd.f32 %v352, %v436
    %v438 = vpop.f32.mrf.mxu0
    %v439 = vpop.f32.mrf.mxu0
    %v440 = vpop.f32.mrf.mxu0
    %441 = vdwg.mxu0
    %v442 = vmax.f32 %v437, 0.0
    %v443 = vpack.c.bf16 %v442, %v442
    %v444 = vld [vmem:[%s9] sm:$0xf]
    %v445 = vld [vmem:[%s9 + $0x4] sm:$0xf]
    %v446 = vld [vmem:[%s9 + $0x8] sm:$0xf]
    %v447 = vld [vmem:[%s9 + $0xc] sm:$0xf]
    %v448 = vld [vmem:[%s9 + $0x10] sm:$0xf]
    %v449 = vld [vmem:[%s9 + $0x14] sm:$0xf]
    %v450 = vld [vmem:[%s9 + $0x18] sm:$0xf]
    %v451 = vld [vmem:[%s9 + $0x1c] sm:$0xf]
    %v452 = vld [vmem:[%s9 + $0x20] sm:$0xf]
    %v453 = vld [vmem:[%s9 + $0x24] sm:$0xf]
    %v454 = vld [vmem:[%s9 + $0x28] sm:$0xf]
    %v455 = vld [vmem:[%s9 + $0x2c] sm:$0xf]
    %v456 = vld [vmem:[%s9 + $0x30] sm:$0xf]
    %v457 = vld [vmem:[%s9 + $0x34] sm:$0xf]
    %v458 = vld [vmem:[%s9 + $0x38] sm:$0xf]
    %v459 = vld [vmem:[%s9 + $0x3c] sm:$0xf]
    %v460 = vld [vmem:[%s10] sm:$0x1]
    %v462 = vlaneseq
    %v463 = vshrl.u32 %v462, 7
    %v464 = vsub.s32 0, %v463
    %v465 = vrot.slane %v460, %v464
    %v483 = vunpack.c.l.b16 %v444
    %v484 = vunpack.c.l.b16 %v445
    %v485 = vunpack.c.l.b16 %v446
    %v486 = vunpack.c.l.b16 %v447
    %v487 = vunpack.c.l.b16 %v448
    %v488 = vunpack.c.l.b16 %v449
    %v489 = vunpack.c.l.b16 %v450
    %v490 = vunpack.c.l.b16 %v451
    %v491 = vunpack.c.l.b16 %v452
    %v492 = vunpack.c.l.b16 %v453
    %v493 = vunpack.c.l.b16 %v454
    %v494 = vunpack.c.l.b16 %v455
    %v495 = vunpack.c.l.b16 %v456
    %v496 = vunpack.c.l.b16 %v457
    %v497 = vunpack.c.l.b16 %v458
    %v498 = vunpack.c.l.b16 %v459
    %v499 = vpack.c.b16 %v484, %v483
    %v500 = vpack.c.b16 %v486, %v485
    %v501 = vpack.c.b16 %v488, %v487
    %v502 = vpack.c.b16 %v490, %v489
    %v503 = vpack.c.b16 %v492, %v491
    %v504 = vpack.c.b16 %v494, %v493
    %v505 = vpack.c.b16 %v496, %v495
    %v506 = vpack.c.b16 %v498, %v497
    %515 = vmatprep.subr.bf16.mxu0 0
    %516 = vmatpush1.bf16.msra.mxu0 %v506
    %517 = vmatprep.subr.bf16.mxu0 0
    %518 = vmatpush1.bf16.msra.mxu0 %v505
    %519 = vmatprep.subr.bf16.mxu0 0
    %520 = vmatpush1.bf16.msra.mxu0 %v504
    %521 = vmatprep.subr.bf16.mxu0 0
    %522 = vmatpush1.bf16.msra.mxu0 %v503
    %523 = vmatprep.subr.bf16.mxu0 0
    %524 = vmatpush1.bf16.msra.mxu0 %v502
    %525 = vmatprep.subr.bf16.mxu0 0
    %526 = vmatpush1.bf16.msra.mxu0 %v501
    %527 = vmatprep.subr.bf16.mxu0 0
    %528 = vmatpush1.bf16.msra.mxu0 %v500
    %529 = vmatprep.subr.bf16.mxu0 0
    %530 = vmatpush1.bf16.msra.mxu0 %v499
    %531 = vmatprep.subr.bf16.mxu0 0
    %532 = vmatpush2.bf16.msra.mxu0 0
    %533 = vmatprep.subr.bf16.mxu0 0
    %534 = vmatpush2.bf16.msra.mxu0 0
    %535 = vmatprep.subr.bf16.mxu0 0
    %536 = vmatpush2.bf16.msra.mxu0 0
    %537 = vmatprep.subr.bf16.mxu0 0
    %538 = vmatpush2.bf16.msra.mxu0 0
    %539 = vmatprep.subr.bf16.mxu0 0
    %540 = vmatpush2.bf16.msra.mxu0 0
    %541 = vmatprep.subr.bf16.mxu0 0
    %542 = vmatpush2.bf16.msra.mxu0 0
    %543 = vmatprep.subr.bf16.mxu0 0
    %544 = vmatpush2.bf16.msra.mxu0 0
    %545 = vmatprep.subr.bf16.mxu0 0
    %546 = vmatpush2.bf16.msra.mxu0 0
    %547 = vmatprep.mubr.bf16.mxu0 0
    %548 = vmatmul.mubr.bf16.gmra.mxu0 %v443
    %v549 = vpop.f32.mrf.mxu0
    %v550 = vadd.f32 %v465, %v549
    %v551 = vpop.f32.mrf.mxu0
    %v552 = vpop.f32.mrf.mxu0
    %v553 = vpop.f32.mrf.mxu0
    %554 = vdwg.mxu0
    %v555 = vmax.f32 %v550, 0.0
    %v556 = vpack.c.bf16 %v555, %v555
    %v557 = vld [vmem:[%s11] sm:$0xf]
    %v558 = vld [vmem:[%s11 + $0x4] sm:$0xf]
    %v559 = vld [vmem:[%s11 + $0x8] sm:$0xf]
    %v560 = vld [vmem:[%s11 + $0xc] sm:$0xf]
    %v561 = vld [vmem:[%s11 + $0x10] sm:$0xf]
    %v562 = vld [vmem:[%s11 + $0x14] sm:$0xf]
    %v563 = vld [vmem:[%s11 + $0x18] sm:$0xf]
    %v564 = vld [vmem:[%s11 + $0x1c] sm:$0xf]
    %v565 = vld [vmem:[%s11 + $0x20] sm:$0xf]
    %v566 = vld [vmem:[%s11 + $0x24] sm:$0xf]
    %v567 = vld [vmem:[%s11 + $0x28] sm:$0xf]
    %v568 = vld [vmem:[%s11 + $0x2c] sm:$0xf]
    %v569 = vld [vmem:[%s11 + $0x30] sm:$0xf]
    %v570 = vld [vmem:[%s11 + $0x34] sm:$0xf]
    %v571 = vld [vmem:[%s11 + $0x38] sm:$0xf]
    %v572 = vld [vmem:[%s11 + $0x3c] sm:$0xf]
    %v573 = vld [vmem:[%s12] sm:$0x1]
    %v575 = vlaneseq
    %v576 = vshrl.u32 %v575, 7
    %v577 = vsub.s32 0, %v576
    %v578 = vrot.slane %v573, %v577
    %v596 = vunpack.c.l.b16 %v557
    %v597 = vunpack.c.l.b16 %v558
    %v598 = vunpack.c.l.b16 %v559
    %v599 = vunpack.c.l.b16 %v560
    %v600 = vunpack.c.l.b16 %v561
    %v601 = vunpack.c.l.b16 %v562
    %v602 = vunpack.c.l.b16 %v563
    %v603 = vunpack.c.l.b16 %v564
    %v604 = vunpack.c.l.b16 %v565
    %v605 = vunpack.c.l.b16 %v566
    %v606 = vunpack.c.l.b16 %v567
    %v607 = vunpack.c.l.b16 %v568
    %v608 = vunpack.c.l.b16 %v569
    %v609 = vunpack.c.l.b16 %v570
    %v610 = vunpack.c.l.b16 %v571
    %v611 = vunpack.c.l.b16 %v572
    %v612 = vpack.c.b16 %v597, %v596
    %v613 = vpack.c.b16 %v599, %v598
    %v614 = vpack.c.b16 %v601, %v600
    %v615 = vpack.c.b16 %v603, %v602
    %v616 = vpack.c.b16 %v605, %v604
    %v617 = vpack.c.b16 %v607, %v606
    %v618 = vpack.c.b16 %v609, %v608
    %v619 = vpack.c.b16 %v611, %v610
    %628 = vmatprep.subr.bf16.mxu0 0
    %629 = vmatpush1.bf16.msra.mxu0 %v619
    %630 = vmatprep.subr.bf16.mxu0 0
    %631 = vmatpush1.bf16.msra.mxu0 %v618
    %632 = vmatprep.subr.bf16.mxu0 0
    %633 = vmatpush1.bf16.msra.mxu0 %v617
    %634 = vmatprep.subr.bf16.mxu0 0
    %635 = vmatpush1.bf16.msra.mxu0 %v616
    %636 = vmatprep.subr.bf16.mxu0 0
    %637 = vmatpush1.bf16.msra.mxu0 %v615
    %638 = vmatprep.subr.bf16.mxu0 0
    %639 = vmatpush1.bf16.msra.mxu0 %v614
    %640 = vmatprep.subr.bf16.mxu0 0
    %641 = vmatpush1.bf16.msra.mxu0 %v613
    %642 = vmatprep.subr.bf16.mxu0 0
    %643 = vmatpush1.bf16.msra.mxu0 %v612
    %644 = vmatprep.subr.bf16.mxu0 0
    %645 = vmatpush2.bf16.msra.mxu0 0
    %646 = vmatprep.subr.bf16.mxu0 0
    %647 = vmatpush2.bf16.msra.mxu0 0
    %648 = vmatprep.subr.bf16.mxu0 0
    %649 = vmatpush2.bf16.msra.mxu0 0
    %650 = vmatprep.subr.bf16.mxu0 0
    %651 = vmatpush2.bf16.msra.mxu0 0
    %652 = vmatprep.subr.bf16.mxu0 0
    %653 = vmatpush2.bf16.msra.mxu0 0
    %654 = vmatprep.subr.bf16.mxu0 0
    %655 = vmatpush2.bf16.msra.mxu0 0
    %656 = vmatprep.subr.bf16.mxu0 0
    %657 = vmatpush2.bf16.msra.mxu0 0
    %658 = vmatprep.subr.bf16.mxu0 0
    %659 = vmatpush2.bf16.msra.mxu0 0
    %660 = vmatprep.mubr.bf16.mxu0 0
    %661 = vmatmul.mubr.bf16.gmra.mxu0 %v556
    %v662 = vpop.f32.mrf.mxu0
    %v663 = vadd.f32 %v578, %v662
    %v664 = vpop.f32.mrf.mxu0
    %v665 = vpop.f32.mrf.mxu0
    %v666 = vpop.f32.mrf.mxu0
    %667 = vdwg.mxu0
    %668 = vst [vmem:[#allocation2] sm:$0xff] %v663
    // Predicated region
    $region54: #{net_forward.1} parent=1 // pred_check
      _
    $region55: #{net_forward.1} parent=1 // pred_check_branch
      %670 = sbr.rel (0) target = $region57
    $region56: #{net_forward.1} parent=1 // pred_region
      %s672 = ssub.s32 128, 128
      %673 = vsyncadd [#allocation3], %s672
      %s675 = sshll.u32 [#allocation2], 4
      %s676 = int_to_ptr.vmem [resolvable:$true] %s675
      %678 = dma.vmem_to_hbm [thread:$0]  %s676, 128, %s13, [#allocation3]
    $region57: #{net_forward.1} parent=1 // pred_fallthru
      _
    // Predicated region
    $region58: #{net_forward.1} parent=1 // pred_check
      _
    $region59: #{net_forward.1} parent=1 // pred_check_branch
      %680 = sbr.rel (0) target = $region61
    $region60: #{net_forward.1} parent=1 // pred_region
      %681 = dma.done [#allocation3], 128
    $region61: #{net_forward.1} parent=1 // pred_fallthru
      _
    %682 = vsyncpa [#allocation3], 1

</llo_original>
